<compile_context>
chip_gen: v7x
topology: tpu7x:2x2x1
jax: 0.10.0
libtpu: 0.0.40
codegen_flags: <defaults>
</compile_context>

<pallas_src>
import math
from functools import partial

import jax
import jax.numpy as jnp
from jax import lax
from jax.experimental import pallas as pl
from jax.experimental.pallas import tpu as pltpu


_CPARAMS = pltpu.CompilerParams(
    dimension_semantics=("parallel",),          # batch steps shard across TCs
    vmem_limit_bytes=32 * 1024 * 1024,          # explicit budget (>= v5e default)
)

_DN_LAST = (((1,), (1,)), ((), ()))             # contract last axis of both (A @ B^T)


# ---------------------------------------------------------------------------
# Kernels
# ---------------------------------------------------------------------------

def _phase_space_kernel(x_ref, w_ref, real_ref, imag_ref):
    """DynamicPhaseSpace (synthetic): phase = tanh(x @ W) * pi; (cos, sin) rotate."""
    x = x_ref[0]                                              # (L, D) f32
    xw = jnp.dot(x.astype(jnp.bfloat16), w_ref[...].astype(jnp.bfloat16),
                 preferred_element_type=jnp.float32)          # MXU, f32 acc
    phase = jnp.tanh(xw) * jnp.pi                             # EUP
    real_ref[0] = x * jnp.cos(phase)
    imag_ref[0] = x * jnp.sin(phase)


def _layer_kernel(real_ref, imag_ref, g_ref, b_ref, real_out_ref, imag_out_ref,
                  *, eps):
    """Fused: complex attention (q=k=v=(real,imag)) + residual + LayerNorm.

    real_ref / imag_ref: (1, L, D); g_ref / b_ref: (1, D).
    """
    r = real_ref[0]                                           # (L, D) f32
    im = imag_ref[0]
    d = r.shape[-1]
    scale = 1.0 / math.sqrt(d)

    rb = r.astype(jnp.bfloat16)
    ib = im.astype(jnp.bfloat16)

    # scores = (r r^T + i i^T) / sqrt(D) — dot_general contracting last axes,
    # no in-kernel .T.
    scores = (lax.dot_general(rb, rb, _DN_LAST, preferred_element_type=jnp.float32)
              + lax.dot_general(ib, ib, _DN_LAST, preferred_element_type=jnp.float32))
    scores = scores * scale                                   # (L, L) f32

    m = jnp.max(scores, axis=-1, keepdims=True)
    p = jnp.exp(scores - m)                                   # EUP
    attn = p * pl.reciprocal(jnp.sum(p, axis=-1, keepdims=True), approx=True)

    ab = attn.astype(jnp.bfloat16)
    attn_r = jnp.dot(ab, rb, preferred_element_type=jnp.float32)   # (L, D)
    attn_i = jnp.dot(ab, ib, preferred_element_type=jnp.float32)

    g = g_ref[...]                                            # (1, D) broadcast
    b = b_ref[...]

    def _ln(x):
        mean = jnp.mean(x, axis=-1, keepdims=True)
        xc = x - mean
        var = jnp.mean(xc * xc, axis=-1, keepdims=True)
        return xc * lax.rsqrt(var + eps) * g + b

    real_out_ref[0] = _ln(r + attn_r)
    imag_out_ref[0] = _ln(im + attn_i)


def _head_kernel(r_ref, i_ref, g_ref, b_ref, wr_ref, wi_ref, bias_ref, o_ref,
                 *, eps):
    """cat([real, imag]) -> LayerNorm(2D) -> Linear(2D -> V), without ever
    materializing the (L, 2D) concat.

    r_ref/i_ref: (1, L, D); g_ref/b_ref: (1, 2D); wr_ref/wi_ref: (D, V)
    (pre-transposed halves of the (V, 2D) torch Linear weight); bias: (1, V).
    """
    r = r_ref[0]                                              # (L, D)
    im = i_ref[0]
    d = r.shape[-1]
    two_d = 2 * d

    # LayerNorm stats over the virtual concat of width 2D.
    s = jnp.sum(r, axis=-1, keepdims=True) + jnp.sum(im, axis=-1, keepdims=True)
    mean = s / two_d
    rc = r - mean
    ic = im - mean
    var = (jnp.sum(rc * rc, axis=-1, keepdims=True)
           + jnp.sum(ic * ic, axis=-1, keepdims=True)) / two_d
    inv = lax.rsqrt(var + eps)

    g = g_ref[...]                                            # (1, 2D)
    b = b_ref[...]
    yr = rc * inv * g[:, :d] + b[:, :d]                       # (L, D)
    yi = ic * inv * g[:, d:] + b[:, d:]

    # logits = y @ W^T + bias  ==  yr @ Wr + yi @ Wi + bias
    logits = (jnp.dot(yr.astype(jnp.bfloat16), wr_ref[...].astype(jnp.bfloat16),
                      preferred_element_type=jnp.float32)
              + jnp.dot(yi.astype(jnp.bfloat16), wi_ref[...].astype(jnp.bfloat16),
                        preferred_element_type=jnp.float32))
    o_ref[0] = logits + bias_ref[...]                         # (1, V) broadcast


# ---------------------------------------------------------------------------
# Pallas wrappers
# ---------------------------------------------------------------------------

def phase_space_pallas(x, phase_w):
    B, L, D = x.shape
    act = pl.BlockSpec((1, L, D), lambda b: (b, 0, 0))
    w_spec = pl.BlockSpec((D, D), lambda b: (0, 0))
    return pl.pallas_call(
        _phase_space_kernel,
        out_shape=(jax.ShapeDtypeStruct((B, L, D), jnp.float32),
                   jax.ShapeDtypeStruct((B, L, D), jnp.float32)),
        grid=(B,),
        in_specs=[act, w_spec],
        out_specs=(act, act),
        compiler_params=_CPARAMS,
    )(x, phase_w)


def quantum_layer_pallas(real, imag, gamma, beta, eps):
    B, L, D = real.shape
    act = pl.BlockSpec((1, L, D), lambda b: (b, 0, 0))
    par = pl.BlockSpec((1, D), lambda b: (0, 0))
    return pl.pallas_call(
        partial(_layer_kernel, eps=eps),
        out_shape=(jax.ShapeDtypeStruct((B, L, D), jnp.float32),
                   jax.ShapeDtypeStruct((B, L, D), jnp.float32)),
        grid=(B,),
        in_specs=[act, act, par, par],
        out_specs=(act, act),
        compiler_params=_CPARAMS,
    )(real, imag, gamma.reshape(1, D), beta.reshape(1, D))


def output_head_pallas(real, imag, gamma, beta, w, bias, eps):
    B, L, D = real.shape
    V, D2 = w.shape
    assert D2 == 2 * D
    # Pre-split and pre-transpose the Linear weight ONCE outside the kernel:
    # logits = y @ W^T + b  ==  yr @ W[:, :D]^T + yi @ W[:, D:]^T + b
    wr = w[:, :D].T                                           # (D, V)
    wi = w[:, D:].T                                           # (D, V)

    act = pl.BlockSpec((1, L, D), lambda b: (b, 0, 0))
    g_spec = pl.BlockSpec((1, D2), lambda b: (0, 0))
    w_spec = pl.BlockSpec((D, V), lambda b: (0, 0))
    bias_spec = pl.BlockSpec((1, V), lambda b: (0, 0))
    out_spec = pl.BlockSpec((1, L, V), lambda b: (b, 0, 0))
    return pl.pallas_call(
        partial(_head_kernel, eps=eps),
        out_shape=jax.ShapeDtypeStruct((B, L, V), jnp.float32),
        grid=(B,),
        in_specs=[act, act, g_spec, g_spec, w_spec, w_spec, bias_spec],
        out_specs=out_spec,
        compiler_params=_CPARAMS,
    )(real, imag, gamma.reshape(1, D2), beta.reshape(1, D2), wr, wi,
      bias.reshape(1, V))


# ---------------------------------------------------------------------------
# Parameter init (deterministic) + full forward
# ---------------------------------------------------------------------------

def init_params(key, vocab_size, dim, n_layers=3):
    keys = jax.random.split(key, 6)
    return {
        # synthetic QuantumEmbedding tables
        "emb_amp": jax.random.normal(keys[0], (vocab_size, dim),
                                     jnp.float32) * 0.02,
        "emb_phase": jax.random.uniform(keys[1], (vocab_size, dim),
                                        jnp.float32, -math.pi, math.pi),
        # synthetic DynamicPhaseSpace projection
        "phase_w": jax.random.normal(keys[2], (dim, dim),
                                     jnp.float32) * (1.0 / math.sqrt(dim)),
        # per-layer phase_norm (LayerNorm(dim), eps=1e-8)
        "ln_gamma": [jnp.ones((dim,), jnp.float32) for _ in range(n_layers)],
        "ln_beta": [jnp.zeros((dim,), jnp.float32) for _ in range(n_layers)],
        # pre_output_norm (LayerNorm(2*dim), default eps=1e-5)
        "pre_gamma": jnp.ones((2 * dim,), jnp.float32),
        "pre_beta": jnp.zeros((2 * dim,), jnp.float32),
        # output Linear: weight (V, 2*dim) ~ N(0, 0.02), bias zeros
        "out_w": jax.random.normal(keys[3], (vocab_size, 2 * dim),
                                   jnp.float32) * 0.02,
        "out_b": jnp.zeros((vocab_size,), jnp.float32),
    }


def quantum_llm_forward(token_ids, params, n_layers=3):
    # --- QuantumEmbedding (synthetic, plain-JAX gather glue) ---
    amp = params["emb_amp"][token_ids]        # (B, L, D)
    ph = params["emb_phase"][token_ids]       # (B, L, D)
    real_embed = amp * jnp.cos(ph)            # reference only propagates the real embed

    # --- DynamicPhaseSpace (synthetic phase rotation) — Pallas ---
    real, imag = phase_space_pallas(real_embed, params["phase_w"])

    # --- 3 x fused (complex attention + residual + LayerNorm) — Pallas ---
    for l in range(n_layers):
        real, imag = quantum_layer_pallas(real, imag,
                                          params["ln_gamma"][l],
                                          params["ln_beta"][l], eps=1e-8)

    # --- (virtual) concat -> LayerNorm(2D) -> Linear(2D, V) — Pallas ---
    return output_head_pallas(real, imag,
                              params["pre_gamma"], params["pre_beta"],
                              params["out_w"], params["out_b"], eps=1e-5)


# ---------------------------------------------------------------------------
# Main
# ---------------------------------------------------------------------------

if __name__ == "__main__":
    B, L, D, VOCAB = 2, 8, 32, 16

    key = jax.random.PRNGKey(0)
    k_ids, k_params = jax.random.split(key)

    token_ids = jax.random.randint(k_ids, (B, L), 0, VOCAB)   # (2, 8) int32
    params = init_params(k_params, VOCAB, D)

    logits = quantum_llm_forward(token_ids, params)
    logits = jax.block_until_ready(logits)

    assert logits.shape == (B, L, VOCAB), logits.shape
    assert logits.dtype == jnp.float32
    assert bool(jnp.all(jnp.isfinite(logits)))
    print("KERNEL_OK")
</pallas_src>

<mosaic_0001>
module attributes {stable_mosaic.version = 11 : i64} {
  func.func @_phase_space_kernel(%arg0: i32, %arg1: memref<1x8x32xf32, #tpu.memory_space<vmem>>, %arg2: memref<32x32xf32, #tpu.memory_space<vmem>>, %arg3: memref<1x8x32xf32, #tpu.memory_space<vmem>>, %arg4: memref<1x8x32xf32, #tpu.memory_space<vmem>>) attributes {dimension_semantics = [#tpu.dimension_semantics<parallel>], iteration_bounds = array<i64: 2>, scalar_prefetch = 0 : i64, scratch_operands = 0 : i64, tpu.core_type = #tpu.core_type<tc>, window_params = [{transform_indices = @transform_0, window_bounds = array<i64: 1, 8, 32>}, {pipeline_mode = #tpu.pipeline_mode<synchronous>, transform_indices = @transform_1, window_bounds = array<i64: 32, 32>}, {transform_indices = @transform_2, window_bounds = array<i64: 1, 8, 32>}, {transform_indices = @transform_3, window_bounds = array<i64: 1, 8, 32>}]} {
    %c0 = arith.constant 0 : index
    %c0_0 = arith.constant 0 : index
    %c0_1 = arith.constant 0 : index
    %0 = vector.load %arg1[%c0, %c0_0, %c0_1] : memref<1x8x32xf32, #tpu.memory_space<vmem>>, vector<1x8x32xf32>
    %1 = vector.shape_cast %0 : vector<1x8x32xf32> to vector<8x32xf32>
    %2 = arith.truncf %1 : vector<8x32xf32> to vector<8x32xbf16>
    %c0_2 = arith.constant 0 : index
    %c0_3 = arith.constant 0 : index
    %3 = vector.load %arg2[%c0_2, %c0_3] : memref<32x32xf32, #tpu.memory_space<vmem>>, vector<32x32xf32>
    %4 = arith.truncf %3 : vector<32x32xf32> to vector<32x32xbf16>
    %cst = arith.constant dense<0.000000e+00> : vector<8x32xf32>
    %5 = tpu.matmul %2, %4, %cst {dimension_numbers = #tpu.dot_dimension_numbers<[1], [0], [0], [1], [0, 0, 1, 1], [], []>} : vector<8x32xbf16>, vector<32x32xbf16>, vector<8x32xf32> -> vector<8x32xf32>
    %6 = math.tanh %5 : vector<8x32xf32>
    %cst_4 = arith.constant 3.14159274 : f32
    %7 = vector.broadcast %cst_4 : f32 to vector<8x32xf32>
    %8 = arith.mulf %6, %7 : vector<8x32xf32>
    %9 = math.cos %8 : vector<8x32xf32>
    %10 = arith.mulf %1, %9 : vector<8x32xf32>
    %c0_5 = arith.constant 0 : index
    %c0_6 = arith.constant 0 : index
    %c0_7 = arith.constant 0 : index
    %11 = vector.load %arg3[%c0_5, %c0_6, %c0_7] : memref<1x8x32xf32, #tpu.memory_space<vmem>>, vector<1x8x32xf32>
    %12 = vector.shape_cast %11 : vector<1x8x32xf32> to vector<8x32xf32>
    %13 = vector.shape_cast %10 : vector<8x32xf32> to vector<1x8x32xf32>
    tpu.vector_store %arg3[%c0_5, %c0_6, %c0_7], %13 {strides = array<i32>} : memref<1x8x32xf32, #tpu.memory_space<vmem>>, vector<1x8x32xf32>,
    %14 = math.sin %8 : vector<8x32xf32>
    %15 = arith.mulf %1, %14 : vector<8x32xf32>
    %c0_8 = arith.constant 0 : index
    %c0_9 = arith.constant 0 : index
    %c0_10 = arith.constant 0 : index
    %16 = vector.load %arg4[%c0_8, %c0_9, %c0_10] : memref<1x8x32xf32, #tpu.memory_space<vmem>>, vector<1x8x32xf32>
    %17 = vector.shape_cast %16 : vector<1x8x32xf32> to vector<8x32xf32>
    %18 = vector.shape_cast %15 : vector<8x32xf32> to vector<1x8x32xf32>
    tpu.vector_store %arg4[%c0_8, %c0_9, %c0_10], %18 {strides = array<i32>} : memref<1x8x32xf32, #tpu.memory_space<vmem>>, vector<1x8x32xf32>,
    return
  }
  func.func @transform_0(%arg0: i32) -> (i32, i32, i32) {
    %c0_i32 = arith.constant 0 : i32
    %c0_i32_0 = arith.constant 0 : i32
    %c0_i32_1 = arith.constant 0 : i32
    return %arg0, %c0_i32, %c0_i32_0 : i32, i32, i32
  }
  func.func @transform_1(%arg0: i32) -> (i32, i32) {
    %c0_i32 = arith.constant 0 : i32
    %c0_i32_0 = arith.constant 0 : i32
    %c0_i32_1 = arith.constant 0 : i32
    return %c0_i32, %c0_i32_0 : i32, i32
  }
  func.func @transform_2(%arg0: i32) -> (i32, i32, i32) {
    %c0_i32 = arith.constant 0 : i32
    %c0_i32_0 = arith.constant 0 : i32
    %c0_i32_1 = arith.constant 0 : i32
    return %arg0, %c0_i32, %c0_i32_0 : i32, i32, i32
  }
  func.func @transform_3(%arg0: i32) -> (i32, i32, i32) {
    %c0_i32 = arith.constant 0 : i32
    %c0_i32_0 = arith.constant 0 : i32
    %c0_i32_1 = arith.constant 0 : i32
    return %arg0, %c0_i32, %c0_i32_0 : i32, i32, i32
  }
}

</mosaic_0001>

<llo_original>
// kernel: tpu_custom_call.1
$region0: #{tpu_custom_call.1}
  #allocation0 [shape = 'u32[]', space=smem, size = 0x4, offset = 0x4, fixed_abs, tag = 'smem constant byte address 0x4 - core index']
  #allocation1 [shape = 'u32[144,128]{1,0:T(1,128)}', space=vmem, size = 0x12000, scoped, tag = 'internal scratch']
  %s0 = inlined_call_operand.hbm [shape: f32[2,8,32], index: 0, kind: input, shape index: {}]
  %s1 = inlined_call_operand.hbm [shape: f32[32,32], index: 1, kind: input, shape index: {}]
  %s2 = inlined_call_operand.hbm [shape: f32[2,8,32], index: 2, kind: output, shape index: {0}]
  %s3 = inlined_call_operand.hbm [shape: f32[2,8,32], index: 3, kind: output, shape index: {1}]
  %4 = xla_tuple %s2, %s3
  %s5 = sld [smem:[#allocation0]]
  $region57: #{tpu_custom_call.1} parent=0
    _
  %s7 = ssub.s32 1, %s5
  %s8 = scalar_select 0, %s7, %s5
  $region1: #{tpu_custom_call.1} parent=0
    #allocation2 [shape = 'u8[8192]{0}', space=vmem, size = 0x2000, scoped, tag = 'input window, operand 0']
    #allocation3 [shape = 's32[2]{0}', space=sflag, size = 0x8, scoped, tag = 'scoped memory for tpu_custom_call.1']
    #allocation4 [shape = 's32[2]{0}', space=sflag, size = 0x8, scoped, tag = 'scoped memory for tpu_custom_call.1']
    #allocation5 [shape = 'u8[16384]{0}', space=vmem, size = 0x4000, scoped, tag = 'input window, operand 1, single buffered']
    #allocation6 [shape = 's32[1]{0}', space=sflag, size = 0x4, scoped, tag = 'scoped memory for tpu_custom_call.1']
    #allocation7 [shape = 'u8[8192]{0}', space=vmem, size = 0x2000, scoped, tag = 'output window, operand 0']
    #allocation8 [shape = 'u8[8192]{0}', space=vmem, size = 0x2000, scoped, tag = 'output window, operand 1']
    #allocation9 [shape = 's32[2]{0}', space=sflag, size = 0x8, scoped, tag = 'scoped memory for tpu_custom_call.1']
    %9 = vsyncpa [#allocation3], 0
    %s10 = scalar_lea.sflag [#allocation3], 1
    %11 = vsyncpa %s10, 0
    %12 = vsyncpa [#allocation6], 0
    %13 = vsyncpa [#allocation4], 0
    %s14 = scalar_lea.sflag [#allocation4], 1
    %15 = vsyncpa %s14, 0
    %16 = vsyncpa [#allocation9], 0
    %s17 = scalar_lea.sflag [#allocation9], 1
    %18 = vsyncpa %s17, 0
    loop: start=0, step=1, limit=4
    $region2: #{tpu_custom_call.1} parent=1 // loop_pre_header
      _
    $region3: #{tpu_custom_call.1} parent=1 // loop_header
      %s20 = sphi 0, %s24
      %p21 = scmp.ge.s32.totalorder %s20, 4
      %s30 = sphi 0, %s32
      %s33 = sphi 0, %s30
      %s34 = sphi 0, %s33
      %s50 = sphi 0, %s34
      %s54 = sphi 0, %s54
      %s56 = sphi 0, %s54
      %s57 = sphi 0, %s56
      %s71 = sphi 0, %s57
      %s77 = sphi 0, %s79
      %s80 = sphi 0, %s77
      %s81 = sphi 0, %s80
      %s97 = sphi 0, %s81
      %s103 = sphi 0, %s105
      %s106 = sphi 0, %s103
      %s107 = sphi 0, %s106
      %s123 = sphi 0, %s107
    $region4: #{tpu_custom_call.1} parent=1 // loop_header_branch
      %23 = sbr.rel (%p21) target = $region8
    $region5: #{tpu_custom_call.1} parent=1 // loop_body
      %s25 = ssub.s32 %s20, 1
      %s26 = ssub.s32 %s20, 2
      %s27 = sadd.s32 %s20, 1
      %s28 = ssub.s32 %s20, %s27
      %p29 = scmp.eq.s32.totalorder %s28, 0
      %s31 = sadd.s32 %s30, 1
      %s32 = scalar_select %p29, %s30, %s31
      %p35 = pneg %p29
      %p36 = scmp.eq.s32.totalorder %s20, 1
      %p37 = por %p35, %p36
      %p38 = scmp.ne.s32.totalorder %s30, %s33
      %p39 = scmp.eq.s32.totalorder %s20, 0
      %p40 = por %p38, %p39
      %p41 = scmp.ne.s32.totalorder %s30, %s33
      %p42 = scmp.eq.s32.totalorder %s25, 1
      %p43 = por %p41, %p42
      %p44 = scmp.ne.s32.totalorder %s33, %s34
      %p45 = scmp.eq.s32.totalorder %s25, 0
      %p46 = por %p44, %p45
      %p47 = scmp.ne.s32.totalorder %s33, %s34
      %p48 = scmp.eq.s32.totalorder %s26, 1
      %p49 = por %p47, %p48
      %p51 = scmp.ne.s32.totalorder %s34, %s50
      %p52 = scmp.eq.s32.totalorder %s26, 0
      %p53 = por %p51, %p52
      %s55 = sadd.s32 %s54, 1
      %p58 = scmp.eq.s32.totalorder %s20, 1
      %p59 = scmp.ne.s32.totalorder %s54, %s56
      %p60 = scmp.eq.s32.totalorder %s20, 0
      %p61 = por %p59, %p60
      %p62 = scmp.ne.s32.totalorder %s54, %s56
      %p63 = scmp.eq.s32.totalorder %s25, 1
      %p64 = por %p62, %p63
      %p65 = scmp.ne.s32.totalorder %s56, %s57
      %p66 = scmp.eq.s32.totalorder %s25, 0
      %p67 = por %p65, %p66
      %p68 = scmp.ne.s32.totalorder %s56, %s57
      %p69 = scmp.eq.s32.totalorder %s26, 1
      %p70 = por %p68, %p69
      %p72 = scmp.ne.s32.totalorder %s57, %s71
      %p73 = scmp.eq.s32.totalorder %s26, 0
      %p74 = por %p72, %p73
      %s75 = ssub.s32 %s20, %s27
      %p76 = scmp.eq.s32.totalorder %s75, 0
      %s78 = sadd.s32 %s77, 1
      %s79 = scalar_select %p76, %s77, %s78
      %p82 = pneg %p76
      %p83 = scmp.eq.s32.totalorder %s20, 1
      %p84 = por %p82, %p83
      %p85 = scmp.ne.s32.totalorder %s77, %s80
      %p86 = scmp.eq.s32.totalorder %s20, 0
      %p87 = por %p85, %p86
      %p88 = scmp.ne.s32.totalorder %s77, %s80
      %p89 = scmp.eq.s32.totalorder %s25, 1
      %p90 = por %p88, %p89
      %p91 = scmp.ne.s32.totalorder %s80, %s81
      %p92 = scmp.eq.s32.totalorder %s25, 0
      %p93 = por %p91, %p92
      %p94 = scmp.ne.s32.totalorder %s80, %s81
      %p95 = scmp.eq.s32.totalorder %s26, 1
      %p96 = por %p94, %p95
      %p98 = scmp.ne.s32.totalorder %s81, %s97
      %p99 = scmp.eq.s32.totalorder %s26, 0
      %p100 = por %p98, %p99
      %s101 = ssub.s32 %s20, %s27
      %p102 = scmp.eq.s32.totalorder %s101, 0
      %s104 = sadd.s32 %s103, 1
      %s105 = scalar_select %p102, %s103, %s104
      %p108 = pneg %p102
      %p109 = scmp.eq.s32.totalorder %s20, 1
      %p110 = por %p108, %p109
      %p111 = scmp.ne.s32.totalorder %s103, %s106
      %p112 = scmp.eq.s32.totalorder %s20, 0
      %p113 = por %p111, %p112
      %p114 = scmp.ne.s32.totalorder %s103, %s106
      %p115 = scmp.eq.s32.totalorder %s25, 1
      %p116 = por %p114, %p115
      %p117 = scmp.ne.s32.totalorder %s106, %s107
      %p118 = scmp.eq.s32.totalorder %s25, 0
      %p119 = por %p117, %p118
      %p120 = scmp.ne.s32.totalorder %s106, %s107
      %p121 = scmp.eq.s32.totalorder %s26, 1
      %p122 = por %p120, %p121
      %p124 = scmp.ne.s32.totalorder %s107, %s123
      %p125 = scmp.eq.s32.totalorder %s26, 0
      %p126 = por %p124, %p125
      %p127 = scmp.le.s32.totalorder 1, %s20
      %p128 = scmp.lt.s32.totalorder %s20, 3
      %p129 = pnand %p127, %p128
      %p130 = pneg %p129
      // Predicated region
      $region9: #{tpu_custom_call.1} parent=5 // pred_check
        _
      $region10: #{tpu_custom_call.1} parent=5 // pred_check_branch
        %132 = sbr.rel (%p129) target = $region12
      $region11: #{tpu_custom_call.1} parent=5 // pred_region
        %s133 = ssub.s32 %s20, 1
        // Predicated region
        $region13: #{tpu_custom_call.1} parent=11 // pred_check
          %p134 = pneg %p67
        $region14: #{tpu_custom_call.1} parent=11 // pred_check_branch
          %136 = sbr.rel (%p134) target = $region16
        $region15: #{tpu_custom_call.1} parent=11 // pred_region
          %s138 = ssub.s32 512, 512
          %139 = vsyncadd [#allocation6], %s138
          %s140 = sshll.u32 [#allocation5], 4
          %s141 = int_to_ptr.vmem [resolvable:$true] %s140
          %146 = dma.hbm_to_vmem [thread:$0]  %s1, 512, %s141, [#allocation6], 128, 128, 8
        $region16: #{tpu_custom_call.1} parent=11 // pred_fallthru
          _
      $region12: #{tpu_custom_call.1} parent=5 // pred_fallthru
        _
      %p147 = scmp.lt.s32.totalorder %s20, 2
      // Predicated region
      $region17: #{tpu_custom_call.1} parent=5 // pred_check
        %p148 = pneg %p147
      $region18: #{tpu_custom_call.1} parent=5 // pred_check_branch
        %150 = sbr.rel (%p148) target = $region20
      $region19: #{tpu_custom_call.1} parent=5 // pred_region
        // Predicated region
        $region21: #{tpu_custom_call.1} parent=19 // pred_check
          %p151 = pneg %p40
        $region22: #{tpu_custom_call.1} parent=19 // pred_check_branch
          %153 = sbr.rel (%p151) target = $region24
        $region23: #{tpu_custom_call.1} parent=19 // pred_region
          %s154 = sand.u32 %s30, 1
          %s155 = scalar_lea.sflag [#allocation3], %s154
          %s156 = sand.u32 %s30, 1
          %s157 = smul.addr %s156, 8
          %s158 = scalar_lea.vmem [#allocation2], %s157
          %s160 = ssub.s32 128, 128
          %161 = vsyncadd %s155, %s160
          %s162 = smul.addr %s20, 128
          %s163 = scalar_lea.hbm %s0, %s162
          %s165 = sshll.u32 %s158, 4
          %s166 = int_to_ptr.vmem [resolvable:$true] %s165
          %168 = dma.hbm_to_vmem [thread:$0]  %s163, 128, %s166, %s155
        $region24: #{tpu_custom_call.1} parent=19 // pred_fallthru
          _
      $region20: #{tpu_custom_call.1} parent=5 // pred_fallthru
        _
      %p169 = scmp.le.s32.totalorder 1, %s20
      %p170 = scmp.lt.s32.totalorder %s20, 3
      %p171 = pnand %p169, %p170
      %p172 = pneg %p171
      // Predicated region
      $region25: #{tpu_custom_call.1} parent=5 // pred_check
        _
      $region26: #{tpu_custom_call.1} parent=5 // pred_check_branch
        %174 = sbr.rel (%p171) target = $region28
      $region27: #{tpu_custom_call.1} parent=5 // pred_region
        %s175 = ssub.s32 %s20, 1
        %s176 = sand.u32 %s33, 1
        %s177 = scalar_lea.sflag [#allocation3], %s176
        %s178 = sand.u32 %s33, 1
        %s179 = smul.addr %s178, 8
        %s180 = scalar_lea.vmem [#allocation2], %s179
        // Predicated region
        $region29: #{tpu_custom_call.1} parent=27 // pred_check
          %p181 = pneg %p46
        $region30: #{tpu_custom_call.1} parent=27 // pred_check_branch
          %183 = sbr.rel (%p181) target = $region32
        $region31: #{tpu_custom_call.1} parent=27 // pred_region
          %184 = dma.done %s177, 128
        $region32: #{tpu_custom_call.1} parent=27 // pred_fallthru
          _
        // Predicated region
        $region33: #{tpu_custom_call.1} parent=27 // pred_check
          %p185 = pneg %p67
        $region34: #{tpu_custom_call.1} parent=27 // pred_check_branch
          %187 = sbr.rel (%p185) target = $region36
        $region35: #{tpu_custom_call.1} parent=27 // pred_region
          %188 = dma.done [#allocation6], 512
        $region36: #{tpu_custom_call.1} parent=27 // pred_fallthru
          _
        %s189 = sand.u32 %s33, 1
        %s190 = scalar_lea.sflag [#allocation3], %s189
        %s191 = sand.u32 %s33, 1
        %s192 = smul.addr %s191, 8
        %s193 = scalar_lea.vmem [#allocation2], %s192
        %p194 = pneg %p46
        %p195 = pneg %p43
        %p196 = pneg %p67
        %p197 = pneg %p64
        %p198 = pneg %p93
        %p199 = pneg %p90
        %s200 = sand.u32 %s80, 1
        %s201 = scalar_lea.sflag [#allocation4], %s200
        %s202 = sand.u32 %s80, 1
        %s203 = smul.addr %s202, 8
        %s204 = scalar_lea.vmem [#allocation7], %s203
        %p205 = pneg %p119
        %p206 = pneg %p116
        %s207 = sand.u32 %s106, 1
        %s208 = scalar_lea.sflag [#allocation9], %s207
        %s209 = sand.u32 %s106, 1
        %s210 = smul.addr %s209, 8
        %s211 = scalar_lea.vmem [#allocation8], %s210
        %v213 = vld [vmem:[%s180] sm:$0xff]
        %v214 = vpack.c.bf16 %v213, %v213
        %v215 = vld [vmem:[#allocation5] sm:$0xff]
        %v216 = vld [vmem:[#allocation5 + $0x8] sm:$0xff]
        %v217 = vld [vmem:[#allocation5 + $0x10] sm:$0xff]
        %v218 = vld [vmem:[#allocation5 + $0x18] sm:$0xff]
        %v219 = vpack.c.bf16 %v216, %v215
        %v220 = vpack.c.bf16 %v218, %v217
        %vm221 = vcmask 261120
        %v223 = vsel %vm221, %v214, 0
        %225 = vmatprep.subr.bf16.mxu0 0
        %226 = vmatpush1.bf16.msra.mxu0 %v219
        %227 = vmatprep.subr.bf16.mxu0 0
        %228 = vmatpush1.bf16.msra.mxu0 %v220
        %229 = vmatprep.subr.bf16.mxu0 0
        %230 = vmatpush1.bf16.msra.mxu0 0
        %231 = vmatprep.subr.bf16.mxu0 0
        %232 = vmatpush1.bf16.msra.mxu0 0
        %233 = vmatprep.subr.bf16.mxu0 0
        %234 = vmatpush1.bf16.msra.mxu0 0
        %235 = vmatprep.subr.bf16.mxu0 0
        %236 = vmatpush1.bf16.msra.mxu0 0
        %237 = vmatprep.subr.bf16.mxu0 0
        %238 = vmatpush1.bf16.msra.mxu0 0
        %239 = vmatprep.subr.bf16.mxu0 0
        %240 = vmatpush1.bf16.msra.mxu0 0
        %241 = vmatprep.subr.bf16.mxu0 0
        %242 = vmatpush1.bf16.msra.mxu0 0
        %243 = vmatprep.subr.bf16.mxu0 0
        %244 = vmatpush1.bf16.msra.mxu0 0
        %245 = vmatprep.subr.bf16.mxu0 0
        %246 = vmatpush1.bf16.msra.mxu0 0
        %247 = vmatprep.subr.bf16.mxu0 0
        %248 = vmatpush1.bf16.msra.mxu0 0
        %249 = vmatprep.subr.bf16.mxu0 0
        %250 = vmatpush1.bf16.msra.mxu0 0
        %251 = vmatprep.subr.bf16.mxu0 0
        %252 = vmatpush1.bf16.msra.mxu0 0
        %253 = vmatprep.subr.bf16.mxu0 0
        %254 = vmatpush1.bf16.msra.mxu0 0
        %255 = vmatprep.subr.bf16.mxu0 0
        %256 = vmatpush1.bf16.msra.mxu0 0
        %257 = vmatprep.mubr.bf16.mxu0 0
        %258 = vmatmul.mubr.bf16.gmra.mrb[0].mxu0 %v223
        %v259 = vpop.f32.mrb[0].mxu0
        %v260 = vadd.f32 0.0, %v259
        %v261 = vpop.f32.mrb[0].mxu0
        %v262 = vpop.f32.mrb[0].mxu0
        %v263 = vpop.f32.mrb[0].mxu0
        %264 = vdwg.mxu0
        %v265 = vtanh.pop %v260
        %v266 = vmul.f32 %v265, 3.1415927
        %v267 = vand.u32 2147483647, %v266
        %vm268 = vcmp.le.f32.partialorder %v267, 0.7853982
        %vm269 = vcmp.lt.s32.totalorder %v266, 0
        %v270 = vand.u32 %v266, 2139095040
        %v271 = vshrl.u32 %v270, 23
        %v272 = vsub.s32 %v271, 127
        %v273 = vand.u32 2147483647, %v266
        %v274 = vand.u32 %v273, 8388607
        %v275 = vor.u32 %v274, 8388608
        %v276 = vsub.s32 0, %v275
        %v277 = vadd.s32 %v272, 1
        %vm278 = vcmp.gt.s32.totalorder %v277, 0
        %v279 = vsel %vm278, %v277, 0
        %v280 = vshrl.u32 %v279, 5
        %v281 = vand.u32 %v279, 31
        %v282 = vsub.s32 32, %v281
        %v283 = vshrl.u32 683565275, %v282
        %v284 = vshll.u32 683565275, %v281
        %v285 = vshrl.u32 2475754826, %v282
        %v286 = vor.u32 %v284, %v285
        %v287 = vshll.u32 2475754826, %v281
        %v288 = vshrl.u32 2131351028, %v282
        %v289 = vor.u32 %v287, %v288
        %v290 = vshll.u32 2131351028, %v281
        %v291 = vshrl.u32 2102212464, %v282
        %v292 = vor.u32 %v290, %v291
        %v293 = vshll.u32 2102212464, %v281
        %v294 = vshrl.u32 920167782, %v282
        %v295 = vor.u32 %v293, %v294
        %v296 = vshll.u32 920167782, %v281
        %v297 = vshrl.u32 1326507024, %v282
        %v298 = vor.u32 %v296, %v297
        %vm299 = vcmp.lt.s32.totalorder %v280, 1
        %vm300 = vcmp.lt.s32.totalorder %v280, 2
        %vm301 = vcmp.lt.s32.totalorder %v280, 3
        %vm302 = vcmp.lt.s32.totalorder %v280, 4
        %v303 = vsel %vm299, %v283, %v286
        %v304 = vsel %vm302, %v292, 2102212464
        %v305 = vsel %vm301, %v289, %v304
        %v306 = vsel %vm300, %v303, %v305
        %v307 = vsel %vm299, %v286, %v289
        %v308 = vsel %vm302, %v295, 920167782
        %v309 = vsel %vm301, %v292, %v308
        %v310 = vsel %vm300, %v307, %v309
        %v311 = vsel %vm299, %v289, %v292
        %v312 = vsel %vm302, %v298, 1326507024
        %v313 = vsel %vm301, %v295, %v312
        %v314 = vsel %vm300, %v311, %v313
        %v315 = vshll.u32 %v275, 8
        %v316 = vmul.u32.u64.compose %v315, %v314
        %v317 = vextract.low.u32 %v316
        %v318 = vextract.high.u32 %v316
        %v319 = vmul.u32.u64.compose %v315, %v310
        %v320 = vextract.low.u32 %v319
        %v321 = vextract.high.u32 %v319
        %v322 = vmul.u32 %v315, %v306
        %v323 = vadd.s32 %v318, %v320
        %vm324 = vc.u32 %v318, %v320
        %v325 = vadd.s32 %v321, 1
        %v326 = vsel %vm324, %v325, %v321
        %v327 = vadd.s32 %v322, %v326
        %v328 = vadd.s32 %v327, 536870912
        %v329 = vshrl.u32 %v328, 30
        %v330 = vshll.u32 %v329, 30
        %v331 = vsub.s32 %v327, %v330
        %vm332 = vcmp.lt.s32.totalorder %v331, 0
        %v333 = vsub.s32 0, %v331
        %v334 = vsel %vm332, %v333, %v331
        %v335 = vclz %v334
        %v336 = vsub.s32 %v335, 2
        %vm337 = vcmp.gt.s32.totalorder 0, %v336
        %v338 = vsel %vm337, 0, %v336
        %v339 = vsub.s32 32, %v338
        %v340 = vshll.u32 %v331, %v338
        %v341 = vshrl.u32 %v323, %v339
        %v342 = vor.u32 %v340, %v341
        %v343 = vsub.s32 4294967266, %v338
        %v344 = vadd.s32 %v343, 127
        %v345 = vshll.u32 %v344, 23
        %v346 = vor.u32 4788187, %v345
        %v347 = vand.u32 2147483647, %v346
        %v349 = vcvt.s32.f32 %v342
        %v350 = vmul.f32 %v349, %v347
        %v351 = vxor.u32 %v350, 2147483648
        %v352 = vsel %vm269, %v351, %v350
        %v353 = vsub.s32 4, %v329
        %v354 = vsel %vm269, %v353, %v329
        %v355 = vsel %vm268, %v266, %v352
        %v356 = vsel %vm268, 0, %v354
        %v357 = vcosq.f32.pop %v355
        %v358 = vsinq.f32.pop %v355
        %vm359 = vweird.f32 %v266
        %v360 = vand.u32 %v356, 3
        %vm361 = vcmp.lt.s32.totalorder %v360, 2
        %vm362 = vcmp.eq.s32.totalorder %v360, 0
        %v363 = vxor.u32 %v358, 2147483648
        %v364 = vsel %vm362, %v357, %v363
        %vm365 = vcmp.eq.s32.totalorder %v360, 2
        %v366 = vxor.u32 %v357, 2147483648
        %v367 = vsel %vm365, %v366, %v358
        %v368 = vsel %vm361, %v364, %v367
        %v369 = vsel %vm359, nan, %v368
        %v370 = vmul.f32 %v213, %v369
        %371 = vst.msk [vmem:[%s204] sm:$0xff] %vm221, %v370
        %v372 = vand.u32 2147483647, %v266
        %vm373 = vcmp.le.f32.partialorder %v372, 0.7853982
        %vm374 = vcmp.lt.s32.totalorder %v266, 0
        %v375 = vand.u32 %v266, 2139095040
        %v376 = vshrl.u32 %v375, 23
        %v377 = vsub.s32 %v376, 127
        %v378 = vand.u32 2147483647, %v266
        %v379 = vand.u32 %v378, 8388607
        %v380 = vor.u32 %v379, 8388608
        %v381 = vsub.s32 0, %v380
        %v382 = vadd.s32 %v377, 1
        %vm383 = vcmp.gt.s32.totalorder %v382, 0
        %v384 = vsel %vm383, %v382, 0
        %v385 = vshrl.u32 %v384, 5
        %v386 = vand.u32 %v384, 31
        %v387 = vsub.s32 32, %v386
        %v388 = vshrl.u32 683565275, %v387
        %v389 = vshll.u32 683565275, %v386
        %v390 = vshrl.u32 2475754826, %v387
        %v391 = vor.u32 %v389, %v390
        %v392 = vshll.u32 2475754826, %v386
        %v393 = vshrl.u32 2131351028, %v387
        %v394 = vor.u32 %v392, %v393
        %v395 = vshll.u32 2131351028, %v386
        %v396 = vshrl.u32 2102212464, %v387
        %v397 = vor.u32 %v395, %v396
        %v398 = vshll.u32 2102212464, %v386
        %v399 = vshrl.u32 920167782, %v387
        %v400 = vor.u32 %v398, %v399
        %v401 = vshll.u32 920167782, %v386
        %v402 = vshrl.u32 1326507024, %v387
        %v403 = vor.u32 %v401, %v402
        %vm404 = vcmp.lt.s32.totalorder %v385, 1
        %vm405 = vcmp.lt.s32.totalorder %v385, 2
        %vm406 = vcmp.lt.s32.totalorder %v385, 3
        %vm407 = vcmp.lt.s32.totalorder %v385, 4
        %v408 = vsel %vm404, %v388, %v391
        %v409 = vsel %vm407, %v397, 2102212464
        %v410 = vsel %vm406, %v394, %v409
        %v411 = vsel %vm405, %v408, %v410
        %v412 = vsel %vm404, %v391, %v394
        %v413 = vsel %vm407, %v400, 920167782
        %v414 = vsel %vm406, %v397, %v413
        %v415 = vsel %vm405, %v412, %v414
        %v416 = vsel %vm404, %v394, %v397
        %v417 = vsel %vm407, %v403, 1326507024
        %v418 = vsel %vm406, %v400, %v417
        %v419 = vsel %vm405, %v416, %v418
        %v420 = vshll.u32 %v380, 8
        %v421 = vmul.u32.u64.compose %v420, %v419
        %v422 = vextract.low.u32 %v421
        %v423 = vextract.high.u32 %v421
        %v424 = vmul.u32.u64.compose %v420, %v415
        %v425 = vextract.low.u32 %v424
        %v426 = vextract.high.u32 %v424
        %v427 = vmul.u32 %v420, %v411
        %v428 = vadd.s32 %v423, %v425
        %vm429 = vc.u32 %v423, %v425
        %v430 = vadd.s32 %v426, 1
        %v431 = vsel %vm429, %v430, %v426
        %v432 = vadd.s32 %v427, %v431
        %v433 = vadd.s32 %v432, 536870912
        %v434 = vshrl.u32 %v433, 30
        %v435 = vshll.u32 %v434, 30
        %v436 = vsub.s32 %v432, %v435
        %vm437 = vcmp.lt.s32.totalorder %v436, 0
        %v438 = vsub.s32 0, %v436
        %v439 = vsel %vm437, %v438, %v436
        %v440 = vclz %v439
        %v441 = vsub.s32 %v440, 2
        %vm442 = vcmp.gt.s32.totalorder 0, %v441
        %v443 = vsel %vm442, 0, %v441
        %v444 = vsub.s32 32, %v443
        %v445 = vshll.u32 %v436, %v443
        %v446 = vshrl.u32 %v428, %v444
        %v447 = vor.u32 %v445, %v446
        %v448 = vsub.s32 4294967266, %v443
        %v449 = vadd.s32 %v448, 127
        %v450 = vshll.u32 %v449, 23
        %v451 = vor.u32 4788187, %v450
        %v452 = vand.u32 2147483647, %v451
        %v454 = vcvt.s32.f32 %v447
        %v455 = vmul.f32 %v454, %v452
        %v456 = vxor.u32 %v455, 2147483648
        %v457 = vsel %vm374, %v456, %v455
        %v458 = vsub.s32 4, %v434
        %v459 = vsel %vm374, %v458, %v434
        %v460 = vsel %vm373, %v266, %v457
        %v461 = vsel %vm373, 0, %v459
        %v462 = vcosq.f32.pop %v460
        %v463 = vsinq.f32.pop %v460
        %vm464 = vweird.f32 %v266
        %v465 = vadd.s32 %v461, 3
        %v466 = vand.u32 %v465, 3
        %vm467 = vcmp.lt.s32.totalorder %v466, 2
        %vm468 = vcmp.eq.s32.totalorder %v466, 0
        %v469 = vxor.u32 %v463, 2147483648
        %v470 = vsel %vm468, %v462, %v469
        %vm471 = vcmp.eq.s32.totalorder %v466, 2
        %v472 = vxor.u32 %v462, 2147483648
        %v473 = vsel %vm471, %v472, %v463
        %v474 = vsel %vm467, %v470, %v473
        %v475 = vsel %vm464, nan, %v474
        %v476 = vmul.f32 %v213, %v475
        %477 = vst.msk [vmem:[%s211] sm:$0xff] %vm221, %v476
        %s478 = sand.u32 %s80, 1
        %s479 = scalar_lea.sflag [#allocation4], %s478
        %s480 = sand.u32 %s80, 1
        %s481 = smul.addr %s480, 8
        %s482 = scalar_lea.vmem [#allocation7], %s481
        %s483 = sand.u32 %s106, 1
        %s484 = scalar_lea.sflag [#allocation9], %s483
        %s485 = sand.u32 %s106, 1
        %s486 = smul.addr %s485, 8
        %s487 = scalar_lea.vmem [#allocation8], %s486
        // Predicated region
        $region37: #{tpu_custom_call.1} parent=27 // pred_check
          %p488 = pneg %p90
        $region38: #{tpu_custom_call.1} parent=27 // pred_check_branch
          %490 = sbr.rel (%p488) target = $region40
        $region39: #{tpu_custom_call.1} parent=27 // pred_region
          %s492 = ssub.s32 128, 128
          %493 = vsyncadd %s479, %s492
          %s494 = smul.addr %s25, 128
          %s495 = scalar_lea.hbm %s2, %s494
          %s497 = sshll.u32 %s482, 4
          %s498 = int_to_ptr.vmem [resolvable:$true] %s497
          %500 = dma.vmem_to_hbm [thread:$0]  %s498, 128, %s495, %s479
        $region40: #{tpu_custom_call.1} parent=27 // pred_fallthru
          _
        // Predicated region
        $region41: #{tpu_custom_call.1} parent=27 // pred_check
          %p501 = pneg %p116
        $region42: #{tpu_custom_call.1} parent=27 // pred_check_branch
          %503 = sbr.rel (%p501) target = $region44
        $region43: #{tpu_custom_call.1} parent=27 // pred_region
          %s505 = ssub.s32 128, 128
          %506 = vsyncadd %s484, %s505
          %s507 = smul.addr %s25, 128
          %s508 = scalar_lea.hbm %s3, %s507
          %s510 = sshll.u32 %s487, 4
          %s511 = int_to_ptr.vmem [resolvable:$true] %s510
          %513 = dma.vmem_to_hbm [thread:$0]  %s511, 128, %s508, %s484
        $region44: #{tpu_custom_call.1} parent=27 // pred_fallthru
          _
      $region28: #{tpu_custom_call.1} parent=5 // pred_fallthru
        _
      %p514 = scmp.le.s32.totalorder 2, %s20
      // Predicated region
      $region45: #{tpu_custom_call.1} parent=5 // pred_check
        %p515 = pneg %p514
      $region46: #{tpu_custom_call.1} parent=5 // pred_check_branch
        %517 = sbr.rel (%p515) target = $region48
      $region47: #{tpu_custom_call.1} parent=5 // pred_region
        %s518 = ssub.s32 %s20, 2
        // Predicated region
        $region49: #{tpu_custom_call.1} parent=47 // pred_check
          %p519 = pneg %p96
        $region50: #{tpu_custom_call.1} parent=47 // pred_check_branch
          %521 = sbr.rel (%p519) target = $region52
        $region51: #{tpu_custom_call.1} parent=47 // pred_region
          %s522 = sand.u32 %s81, 1
          %s523 = scalar_lea.sflag [#allocation4], %s522
          %s524 = sand.u32 %s81, 1
          %s525 = smul.addr %s524, 8
          %s526 = scalar_lea.vmem [#allocation7], %s525
          %527 = dma.done %s523, 128
        $region52: #{tpu_custom_call.1} parent=47 // pred_fallthru
          _
        // Predicated region
        $region53: #{tpu_custom_call.1} parent=47 // pred_check
          %p528 = pneg %p122
        $region54: #{tpu_custom_call.1} parent=47 // pred_check_branch
          %530 = sbr.rel (%p528) target = $region56
        $region55: #{tpu_custom_call.1} parent=47 // pred_region
          %s531 = sand.u32 %s107, 1
          %s532 = scalar_lea.sflag [#allocation9], %s531
          %s533 = sand.u32 %s107, 1
          %s534 = smul.addr %s533, 8
          %s535 = scalar_lea.vmem [#allocation8], %s534
          %536 = dma.done %s532, 128
        $region56: #{tpu_custom_call.1} parent=47 // pred_fallthru
          _
      $region48: #{tpu_custom_call.1} parent=5 // pred_fallthru
        _
    $region6: #{tpu_custom_call.1} parent=1 // loop_footer
      %s24 = sadd.s32 1, %s20
    $region7: #{tpu_custom_call.1} parent=1 // loop_footer_branch
      %19 = sbr.rel target = $region3
    $region8: #{tpu_custom_call.1} parent=1 // loop_exit
      _
    %537 = vsyncpa [#allocation3], 1
    %s538 = scalar_lea.sflag [#allocation3], 1
    %539 = vsyncpa %s538, 1
    %540 = vsyncpa [#allocation6], 1
    %541 = vsyncpa [#allocation4], 1
    %s542 = scalar_lea.sflag [#allocation4], 1
    %543 = vsyncpa %s542, 1
    %544 = vsyncpa [#allocation9], 1
    %s545 = scalar_lea.sflag [#allocation9], 1
    %546 = vsyncpa %s545, 1

</llo_original>
